<compile_context>
chip_gen: v7x
topology: tpu7x:2x2x1
jax: 0.10.0
libtpu: 0.0.40
codegen_flags: <defaults>
</compile_context>

<pallas_src>
import functools

import jax
import jax.numpy as jnp
from jax import lax
from jax.experimental import pallas as pl
from jax.experimental.pallas import tpu as pltpu

_LANE = 128
_TARGET_TILE_BYTES = 8 * 1024 * 1024   # per buffered tile; diminishing returns past ~8 MiB
_MIN_GRID_STEPS = 4                    # keep the pipeline busy / let megacore shard rows


def _round_up(n, m):
    return ((n + m - 1) // m) * m


def _sublane(dtype):
    # 8 rows for 4-byte dtypes, 16 for bf16, 32 for int8/fp8.
    itemsize = jnp.dtype(dtype).itemsize
    return max(8, 32 // max(itemsize, 1))


def _vmem_limit_bytes():
    """Generation-aware scoped-VMEM limit (128 MiB on v5e/v6e, 64 MiB on v7x)."""
    try:
        cap = int(getattr(pltpu.get_tpu_info(), "vmem_capacity_bytes", 0)) or (64 << 20)
    except Exception:
        cap = 64 << 20                 # conservative default works everywhere
    return min((cap * 3) // 4, 96 << 20)   # leave headroom for compiler scratch


def _pow_sum(xf, power):
    """sum(x**power, axis=1, keepdims=True) in f32."""
    if power == 2:
        p = xf * xf
    elif power == 1:
        p = xf
    elif isinstance(power, int) and power > 2:
        p = xf
        for _ in range(power - 1):
            p = p * xf
    else:
        # TODO(synk): general non-integer power keeps the pow -> exp/log lowering.
        p = xf ** power
    return jnp.sum(p, axis=1, keepdims=True)


def _inv_norm(s, power):
    """1 / s**(1/power); routed to the EUP where possible."""
    if power == 2:
        return lax.rsqrt(s)
    if power == 1:
        return pl.reciprocal(s)
    # exp/log form lowers cleanly and matches torch float-pow NaN semantics.
    return jnp.exp(jnp.log(s) * (-1.0 / power))


# --------------------------------------------------------------------------
# Simple path: full feature width per block, 1-D row grid.
# --------------------------------------------------------------------------
def _normalize_kernel(x_ref, o_ref, *, power):
    xf = x_ref[...].astype(jnp.float32)
    inv = _inv_norm(_pow_sum(xf, power), power)          # (rows, 1)
    o_ref[...] = (xf * inv).astype(o_ref.dtype)


# --------------------------------------------------------------------------
# Split-D fallback: feature axis tiled; two passes over each row block.
#   grid axis 1 has 2*n_chunks steps: j < n_chunks accumulates sum(x**p),
#   j >= n_chunks writes out chunk (j - n_chunks) scaled by the inverse norm.
# --------------------------------------------------------------------------
def _normalize_split_d_kernel(x_ref, o_ref, s_ref, *, power, n_chunks, d_chunk, d_total):
    j = pl.program_id(1)

    @pl.when(j == 0)
    def _():
        s_ref[...] = jnp.zeros_like(s_ref)

    @pl.when(j < n_chunks)
    def _():
        xf = x_ref[...].astype(jnp.float32)
        # The last chunk may extend past the true feature extent; its padded
        # lanes hold unspecified data, so mask them out of the reduction.
        col = j * d_chunk + lax.broadcasted_iota(jnp.int32, xf.shape, 1)
        xf = jnp.where(col < d_total, xf, 0.0)
        s_ref[...] += _pow_sum(xf, power)

    @pl.when(j == n_chunks)
    def _():
        s_ref[...] = _inv_norm(s_ref[...], power)        # reuse scratch for inv norm

    @pl.when(j >= n_chunks)
    def _():
        xf = x_ref[...].astype(jnp.float32)
        o_ref[...] = (xf * s_ref[...]).astype(o_ref.dtype)


# --------------------------------------------------------------------------
# Wrapper
# --------------------------------------------------------------------------
def normalize(x, power=2, block_rows=None, d_chunk=None):
    """L-p normalize along axis 1 of a 2-D array (batch, features)."""
    assert x.ndim == 2, "kernel expects (batch, features)"
    B, D = x.shape
    dtype = x.dtype
    itemsize = jnp.dtype(dtype).itemsize
    sub = _sublane(dtype)

    vmem_limit = _vmem_limit_bytes()
    work_budget = max(vmem_limit - (2 << 20), 4 << 20)

    # Live VMEM per row at full feature width: 2x double-buffered input tile +
    # 2x output tile (input dtype) + ~2 f32 temporaries the compiler may keep.
    per_row_bytes = D * (4 * itemsize + 2 * 4)

    use_split_d = (d_chunk is not None) or (sub * per_row_bytes > work_budget)

    if not use_split_d:
        if block_rows is None:
            budget_rows = max(work_budget // per_row_bytes, sub)
            target_rows = max(_TARGET_TILE_BYTES // max(D * itemsize, 1), sub)
            pipeline_rows = max(_round_up(pl.cdiv(B, _MIN_GRID_STEPS), sub), sub)
            block_rows = min(budget_rows, target_rows, pipeline_rows)
        if B <= sub:
            block_rows = B                         # block dim == full dim: always legal
        else:
            block_rows = min(block_rows, _round_up(B, sub))
            block_rows = max((block_rows // sub) * sub, sub)

        grid = (pl.cdiv(B, block_rows),)
        kernel = functools.partial(_normalize_kernel, power=power)
        return pl.pallas_call(
            kernel,
            out_shape=jax.ShapeDtypeStruct((B, D), dtype),
            grid_spec=pltpu.PrefetchScalarGridSpec(
                num_scalar_prefetch=0,
                grid=grid,
                in_specs=[pl.BlockSpec((block_rows, D), lambda i: (i, 0))],
                out_specs=pl.BlockSpec((block_rows, D), lambda i: (i, 0)),
            ),
            compiler_params=pltpu.CompilerParams(
                dimension_semantics=("parallel",),
                vmem_limit_bytes=vmem_limit,
            ),
            cost_estimate=pl.CostEstimate(
                flops=3 * B * D,
                transcendentals=B,
                bytes_accessed=2 * B * D * itemsize,
            ),
        )(x)

    # ----- split-D fallback ------------------------------------------------
    if block_rows is None:
        block_rows = max(_round_up(min(pl.cdiv(B, _MIN_GRID_STEPS), 512), sub), sub)
    if B <= sub:
        block_rows = B
    else:
        block_rows = min(block_rows, _round_up(B, sub))
        block_rows = max((block_rows // sub) * sub, sub)

    if d_chunk is None:
        per_col_bytes = block_rows * (4 * itemsize + 2 * 4)
        d_chunk = max((work_budget // per_col_bytes) // _LANE * _LANE, _LANE)
    d_chunk = max((d_chunk // _LANE) * _LANE, _LANE)
    d_chunk = min(d_chunk, _round_up(D, _LANE))

    n_chunks = pl.cdiv(D, d_chunk)
    grid = (pl.cdiv(B, block_rows), 2 * n_chunks)
    kernel = functools.partial(
        _normalize_split_d_kernel,
        power=power, n_chunks=n_chunks, d_chunk=d_chunk, d_total=D,
    )

    in_map = lambda i, j: (i, j % n_chunks)
    out_map = lambda i, j: (i, jnp.maximum(j - n_chunks, 0))

    return pl.pallas_call(
        kernel,
        out_shape=jax.ShapeDtypeStruct((B, D), dtype),
        grid_spec=pltpu.PrefetchScalarGridSpec(
            num_scalar_prefetch=0,
            grid=grid,
            in_specs=[pl.BlockSpec((block_rows, d_chunk), in_map)],
            out_specs=pl.BlockSpec((block_rows, d_chunk), out_map),
            scratch_shapes=[pltpu.VMEM((block_rows, 1), jnp.float32)],
        ),
        compiler_params=pltpu.CompilerParams(
            dimension_semantics=("parallel", "arbitrary"),
            vmem_limit_bytes=vmem_limit,
        ),
    )(x)


def normalize_ref(x, power=2):
    # Pure-JAX reference mirroring the PyTorch module exactly.
    norm = jnp.sum(x ** power, axis=1, keepdims=True) ** (1.0 / power)
    return x / norm


if __name__ == "__main__":
    key = jax.random.PRNGKey(0)
    k1, k2, k3, k4 = jax.random.split(key, 4)

    # 1) Small dense case (batch=8, features=32), power=2.
    x1 = jax.random.normal(k1, (8, 32), dtype=jnp.float32)
    o1 = jax.block_until_ready(normalize(x1, power=2))
    assert o1.shape == x1.shape and o1.dtype == x1.dtype
    assert jnp.allclose(o1, normalize_ref(x1, 2), atol=1e-5, rtol=1e-5)

    # 2) Ragged batch + non-128 feature dim: partial last row block and masked
    #    lane stores, with zero wrapper-side padding/slicing.
    x2 = jax.random.normal(k2, (50, 200), dtype=jnp.float32)
    o2 = jax.block_until_ready(normalize(x2, power=2))
    assert jnp.allclose(o2, normalize_ref(x2, 2), atol=1e-5, rtol=1e-5)

    # 3) Integer power != 2 (positive input keeps the reference NaN-free).
    x3 = jnp.abs(jax.random.normal(k3, (16, 64), dtype=jnp.float32)) + 0.1
    o3 = jax.block_until_ready(normalize(x3, power=3))
    assert jnp.allclose(o3, normalize_ref(x3, 3), atol=1e-5, rtol=1e-4)

    # 4) Force the split-D (feature-tiled) fallback, including a partial last chunk.
    x4 = jax.random.normal(k4, (40, 300), dtype=jnp.float32)
    o4 = jax.block_until_ready(normalize(x4, power=2, block_rows=16, d_chunk=128))
    assert jnp.allclose(o4, normalize_ref(x4, 2), atol=1e-5, rtol=1e-5)

    print("KERNEL_OK")
</pallas_src>

<mosaic_0001>
module attributes {stable_mosaic.version = 11 : i64} {
  func.func @_normalize_kernel(%arg0: i32, %arg1: memref<8x32xf32, #tpu.memory_space<vmem>>, %arg2: memref<8x32xf32, #tpu.memory_space<vmem>>) attributes {dimension_semantics = [#tpu.dimension_semantics<parallel>], iteration_bounds = array<i64: 1>, scalar_prefetch = 0 : i64, scratch_operands = 0 : i64, tpu.core_type = #tpu.core_type<tc>, window_params = [{transform_indices = @transform_0, window_bounds = array<i64: 8, 32>}, {transform_indices = @transform_1, window_bounds = array<i64: 8, 32>}]} {
    %c0 = arith.constant 0 : index
    %c0_0 = arith.constant 0 : index
    %0 = vector.load %arg1[%c0, %c0_0] : memref<8x32xf32, #tpu.memory_space<vmem>>, vector<8x32xf32>
    %1 = arith.mulf %0, %0 : vector<8x32xf32>
    %cst = arith.constant dense<0.000000e+00> : vector<8xf32>
    %2 = vector.multi_reduction <add>, %1, %cst [1] : vector<8x32xf32> to vector<8xf32>
    %3 = vector.shape_cast %2 : vector<8xf32> to vector<8x1xf32>
    %4 = math.rsqrt %3 : vector<8x1xf32>
    %5 = vector.broadcast %4 : vector<8x1xf32> to vector<8x32xf32>
    %6 = arith.mulf %0, %5 : vector<8x32xf32>
    %c0_1 = arith.constant 0 : index
    %c0_2 = arith.constant 0 : index
    %7 = vector.load %arg2[%c0_1, %c0_2] : memref<8x32xf32, #tpu.memory_space<vmem>>, vector<8x32xf32>
    tpu.vector_store %arg2[%c0_1, %c0_2], %6 {strides = array<i32>} : memref<8x32xf32, #tpu.memory_space<vmem>>, vector<8x32xf32>,
    return
  }
  func.func @transform_0(%arg0: i32) -> (i32, i32) {
    %c0_i32 = arith.constant 0 : i32
    %c0_i32_0 = arith.constant 0 : i32
    return %arg0, %c0_i32 : i32, i32
  }
  func.func @transform_1(%arg0: i32) -> (i32, i32) {
    %c0_i32 = arith.constant 0 : i32
    %c0_i32_0 = arith.constant 0 : i32
    return %arg0, %c0_i32 : i32, i32
  }
}

</mosaic_0001>

<llo_original>
// kernel: tpu_custom_call.1
$region0: #{tpu_custom_call.1}
  #allocation0 [shape = 'u32[]', space=smem, size = 0x4, offset = 0x4, fixed_abs, tag = 'smem constant byte address 0x4 - core index']
  #allocation1 [shape = 'u32[144,128]{1,0:T(1,128)}', space=vmem, size = 0x12000, scoped, tag = 'internal scratch']
  %s0 = inlined_call_operand.hbm [shape: f32[8,32], index: 0, kind: input, shape index: {}]
  %s1 = inlined_call_operand.hbm [shape: f32[8,32], index: 1, kind: output, shape index: {}]
  %s2 = sld [smem:[#allocation0]]
  $region18: #{tpu_custom_call.1} parent=0
    _
  %s4 = ssub.s32 1, %s2
  %s5 = scalar_select 0, %s4, %s2
  $region1: #{tpu_custom_call.1} parent=0
    #allocation2 [shape = 'u8[4096]{0}', space=vmem, size = 0x1000, scoped, tag = 'input window, operand 0, single buffered']
    #allocation3 [shape = 's32[1]{0}', space=sflag, size = 0x4, scoped, tag = 'scoped memory for tpu_custom_call.1']
    #allocation4 [shape = 's32[1]{0}', space=sflag, size = 0x4, scoped, tag = 'scoped memory for tpu_custom_call.1']
    #allocation5 [shape = 'u8[4096]{0}', space=vmem, size = 0x1000, scoped, tag = 'output window, operand 0, single buffered']
    %6 = vsyncpa [#allocation3], 0
    %7 = vsyncpa [#allocation4], 0
    // Predicated region
    $region2: #{tpu_custom_call.1} parent=1 // pred_check
      _
    $region3: #{tpu_custom_call.1} parent=1 // pred_check_branch
      %9 = sbr.rel (0) target = $region5
    $region4: #{tpu_custom_call.1} parent=1 // pred_region
      %s11 = ssub.s32 128, 128
      %12 = vsyncadd [#allocation3], %s11
      %s14 = sshll.u32 [#allocation2], 4
      %s15 = int_to_ptr.vmem [resolvable:$true] %s14
      %17 = dma.hbm_to_vmem [thread:$0]  %s0, 128, %s15, [#allocation3]
    $region5: #{tpu_custom_call.1} parent=1 // pred_fallthru
      _
    // Predicated region
    $region6: #{tpu_custom_call.1} parent=1 // pred_check
      _
    $region7: #{tpu_custom_call.1} parent=1 // pred_check_branch
      %19 = sbr.rel (0) target = $region9
    $region8: #{tpu_custom_call.1} parent=1 // pred_region
      %20 = dma.done [#allocation3], 128
    $region9: #{tpu_custom_call.1} parent=1 // pred_fallthru
      _
    %v21 = vld [vmem:[#allocation2] sm:$0xff]
    %v22 = vmul.f32 %v21, %v21
    %vm23 = vcmask 261120
    %v24 = vsel %vm23, %v22, 0.0
    %25 = vadd.xlane.f32.xlu0 %v24
    %v26 = vpop.xlane.xlu0 %25
    %v27 = vrsqrt.pop %v26
    %v28 = vmul.f32 %v21, %v27
    %29 = vst.msk [vmem:[#allocation5] sm:$0xff] %vm23, %v28
    // Predicated region
    $region10: #{tpu_custom_call.1} parent=1 // pred_check
      _
    $region11: #{tpu_custom_call.1} parent=1 // pred_check_branch
      %31 = sbr.rel (0) target = $region13
    $region12: #{tpu_custom_call.1} parent=1 // pred_region
      %s33 = ssub.s32 128, 128
      %34 = vsyncadd [#allocation4], %s33
      %s36 = sshll.u32 [#allocation5], 4
      %s37 = int_to_ptr.vmem [resolvable:$true] %s36
      %39 = dma.vmem_to_hbm [thread:$0]  %s37, 128, %s1, [#allocation4]
    $region13: #{tpu_custom_call.1} parent=1 // pred_fallthru
      _
    // Predicated region
    $region14: #{tpu_custom_call.1} parent=1 // pred_check
      _
    $region15: #{tpu_custom_call.1} parent=1 // pred_check_branch
      %41 = sbr.rel (0) target = $region17
    $region16: #{tpu_custom_call.1} parent=1 // pred_region
      %42 = dma.done [#allocation4], 128
    $region17: #{tpu_custom_call.1} parent=1 // pred_fallthru
      _
    %43 = vsyncpa [#allocation3], 1
    %44 = vsyncpa [#allocation4], 1

</llo_original>
